<compile_context>
chip_gen: v6e
topology: v6e:2x2x1
jax: 0.10.0
libtpu: 0.0.40
codegen_flags: <defaults>
</compile_context>

<pallas_src>
import jax
import jax.numpy as jnp
from jax import lax
from jax.experimental import pallas as pl
from jax.experimental.pallas import tpu as pltpu


def _round_up(v, m):
    return ((v + m - 1) // m) * m


def _sublane(dtype):
    # dtype-aware second-minor alignment: 8 rows (f32), 16 (bf16), 32 (int8/fp8).
    return {4: 8, 2: 16, 1: 32}[jnp.dtype(dtype).itemsize]


def _spec(shape, index_map, pipe=None):
    # Only pass pipeline_mode when we actually want deeper buffering.
    if pipe is None:
        return pl.BlockSpec(shape, index_map)
    return pl.BlockSpec(shape, index_map, pipeline_mode=pipe)


# ----------------------------- kernels --------------------------------------

def _linear_kernel_f32(x_ref, w_ref, b_ref, o_ref):
    """f32 output: accumulate directly into the K-resident output block.

    Bias is folded into the k==0 init, so the last K step has no extra
    full-tile add / copy.
    """
    k = pl.program_id(2)

    @pl.when(k == 0)
    def _():
        o_ref[...] = jnp.broadcast_to(b_ref[...].astype(jnp.float32), o_ref.shape)

    # x (tm, tk) contracted against the weight tile in its native (Out, In)
    # layout, i.e. x @ W^T, on the MXU with f32 accumulation. No transpose is
    # materialized anywhere (verified: no wrapper-side W.T, contraction on
    # dims ((1,), (1,))).
    o_ref[...] += lax.dot_general(
        x_ref[...], w_ref[...],
        dimension_numbers=(((1,), (1,)), ((), ())),
        preferred_element_type=jnp.float32,
    )


def _linear_kernel_acc(x_ref, w_ref, b_ref, o_ref, acc_ref):
    """Narrow-output variant (bf16/...): f32 VMEM accumulator, cast in epilogue."""
    k = pl.program_id(2)

    @pl.when(k == 0)
    def _():
        acc_ref[...] = jnp.broadcast_to(b_ref[...].astype(jnp.float32), acc_ref.shape)

    acc_ref[...] += lax.dot_general(
        x_ref[...], w_ref[...],
        dimension_numbers=(((1,), (1,)), ((), ())),
        preferred_element_type=jnp.float32,
    )

    @pl.when(k == pl.num_programs(2) - 1)
    def _():
        o_ref[...] = acc_ref[...].astype(o_ref.dtype)


# ------------------------------ module --------------------------------------

class PallasLinear:
    """Pallas analog of nn.Linear: weight kept in PyTorch (Out, In) layout.

    All parameter padding and N/K tile planning happens once here, hoisted
    out of the per-call path.
    """

    def __init__(self, weight, bias, *, tm_max=512, tn_max=512, tk_max=1024):
        Out, In = weight.shape
        assert bias.shape == (Out,)
        self.out_features = Out
        self.in_features = In
        self.tm_max = tm_max

        # K tiling: grow tk preferentially; balance so padding stays small.
        num_k = pl.cdiv(In, tk_max)
        tk = _round_up(pl.cdiv(In, num_k), 128)
        Inp = num_k * tk

        # N tiling: lane-dense; 256-aligned halves when splitting for v7x.
        num_n = pl.cdiv(Out, tn_max)
        tn = _round_up(pl.cdiv(Out, num_n), 128)
        if num_n == 1 and tn >= 512 and tn % 512 == 0:
            # Expose >= 2 parallel N blocks (v7x dual TensorCore) at no padding
            # cost; halves remain 256-aligned for the v6e/v7x MXU.
            tn //= 2
            num_n = 2
        Outp = num_n * tn

        self.tk, self.tn = tk, tn
        self.num_k, self.num_n = num_k, num_n
        self.Inp, self.Outp = Inp, Outp

        # Pad parameters ONCE (zero padding is mathematically inert).
        self.wp = weight if (Outp == Out and Inp == In) else jnp.pad(
            weight, ((0, Outp - Out), (0, Inp - In)))
        bp = bias if Outp == Out else jnp.pad(bias, (0, Outp - Out))
        self.bp = bp.reshape(1, Outp)

    def __call__(self, x):
        B, In = x.shape
        assert In == self.in_features, "x feature dim must match in_features"
        Out, Outp, Inp = self.out_features, self.Outp, self.Inp
        tn, tk = self.tn, self.tk
        num_n, num_k = self.num_n, self.num_k

        # M tiling: dtype-aware sublane rounding, padding bounded to one
        # sublane group of the balanced tile (no ~2x blowups on odd batches).
        sub = _sublane(x.dtype)
        num_m = pl.cdiv(B, self.tm_max)
        tm = _round_up(pl.cdiv(B, num_m), sub)
        Bp = num_m * tm

        xp = x if (Bp == B and Inp == In) else jnp.pad(
            x, ((0, Bp - B), (0, Inp - In)))

        out_dtype = x.dtype
        f32_out = jnp.dtype(out_dtype) == jnp.dtype(jnp.float32)
        kernel = _linear_kernel_f32 if f32_out else _linear_kernel_acc
        scratch = [] if f32_out else [pltpu.VMEM((tm, tn), jnp.float32)]

        # Deeper input pipelining only for weight-bound shapes (tiny M tile,
        # multiple K steps) where per-step compute can't cover the weight DMA.
        deep = (tm <= 128) and (num_k >= 2)
        in_pipe = pl.Buffered(3) if deep else None
        n_buf = 3 if deep else 2

        x_item = jnp.dtype(x.dtype).itemsize
        w_item = jnp.dtype(self.wp.dtype).itemsize

        # Real streamed bytes: x is re-read once per N tile, W/b once per M tile.
        cost = pl.CostEstimate(
            flops=2 * Bp * Inp * Outp,
            transcendentals=0,
            bytes_accessed=(num_n * Bp * Inp * x_item
                            + num_m * Outp * Inp * w_item
                            + num_m * Outp * w_item
                            + Bp * Outp * x_item),
        )

        # Explicit VMEM budget with headroom: multi-buffered inputs + output
        # (+ optional f32 acc). Clamp to [32 MiB, 48 MiB] -- above v5e's 16 MiB
        # scoped default, safely inside v7x's 64 MiB physical VMEM.
        est = (n_buf * (tm * tk * x_item + tn * tk * w_item + tn * w_item)
               + 2 * tm * tn * jnp.dtype(out_dtype).itemsize)
        if not f32_out:
            est += tm * tn * 4
        vmem_limit = int(min(max(2 * est, 32 * 1024 * 1024), 48 * 1024 * 1024))

        out_p = pl.pallas_call(
            kernel,
            out_shape=jax.ShapeDtypeStruct((Bp, Outp), out_dtype),
            grid=(num_m, num_n, num_k),
            in_specs=[
                _spec((tm, tk), lambda i, j, k: (i, k), in_pipe),   # x tile
                _spec((tn, tk), lambda i, j, k: (j, k), in_pipe),   # W tile (Out, In)
                _spec((1, tn), lambda i, j, k: (0, j)),             # bias tile
            ],
            out_specs=pl.BlockSpec((tm, tn), lambda i, j, k: (i, j)),
            scratch_shapes=scratch,
            compiler_params=pltpu.CompilerParams(
                dimension_semantics=("parallel", "parallel", "arbitrary"),
                vmem_limit_bytes=vmem_limit),
            cost_estimate=cost,
        )(xp, self.wp, self.bp)

        return out_p[:B, :Out]


if __name__ == "__main__":
    # Small shapes consistent with the module: input_size=32, output_size=16, batch=8.
    batch, input_size, output_size = 8, 32, 16

    key = jax.random.PRNGKey(0)
    kx, kw, kb = jax.random.split(key, 3)

    x = jax.random.normal(kx, (batch, input_size), dtype=jnp.float32)
    # Deterministic init mimicking nn.Linear's uniform(-1/sqrt(In), 1/sqrt(In)).
    bound = 1.0 / (input_size ** 0.5)
    weight = jax.random.uniform(kw, (output_size, input_size),
                                minval=-bound, maxval=bound, dtype=jnp.float32)
    bias = jax.random.uniform(kb, (output_size,),
                              minval=-bound, maxval=bound, dtype=jnp.float32)

    model = PallasLinear(weight, bias)   # pads/plans params once (hoisted)
    out = model(x)
    jax.block_until_ready(out)

    # Correctness check against plain JAX reference.
    ref = x @ weight.T + bias
    assert out.shape == (batch, output_size)
    assert jnp.allclose(out, ref, atol=1e-5, rtol=1e-5)

    print("KERNEL_OK")
</pallas_src>

<mosaic_0001>
module attributes {stable_mosaic.version = 11 : i64} {
  func.func @_linear_kernel_f32(%arg0: i32, %arg1: i32, %arg2: i32, %arg3: memref<8x128xf32, #tpu.memory_space<vmem>>, %arg4: memref<128x128xf32, #tpu.memory_space<vmem>>, %arg5: memref<1x128xf32, #tpu.memory_space<vmem>>, %arg6: memref<8x128xf32, #tpu.memory_space<vmem>>) attributes {dimension_semantics = [#tpu.dimension_semantics<parallel>, #tpu.dimension_semantics<parallel>, #tpu.dimension_semantics<arbitrary>], iteration_bounds = array<i64: 1, 1, 1>, scalar_prefetch = 0 : i64, scratch_operands = 0 : i64, tpu.core_type = #tpu.core_type<tc>, window_params = [{transform_indices = @transform_0, window_bounds = array<i64: 8, 128>}, {transform_indices = @transform_1, window_bounds = array<i64: 128, 128>}, {transform_indices = @transform_2, window_bounds = array<i64: 1, 128>}, {transform_indices = @transform_3, window_bounds = array<i64: 8, 128>}]} {
    %c0_i32 = arith.constant 0 : i32
    %0 = arith.cmpi eq, %arg2, %c0_i32 : i32
    %1 = arith.extui %0 : i1 to i32
    %c0_i32_0 = arith.constant 0 : i32
    %2 = arith.cmpi ne, %1, %c0_i32_0 : i32
    scf.if %2 {
      %c0_8 = arith.constant 0 : index
      %c0_9 = arith.constant 0 : index
      %9 = vector.load %arg5[%c0_8, %c0_9] : memref<1x128xf32, #tpu.memory_space<vmem>>, vector<1x128xf32>
      %10 = vector.shape_cast %9 : vector<1x128xf32> to vector<1x128xf32>
      %11 = vector.broadcast %10 : vector<1x128xf32> to vector<8x128xf32>
      %c0_10 = arith.constant 0 : index
      %c0_11 = arith.constant 0 : index
      %12 = vector.load %arg6[%c0_10, %c0_11] : memref<8x128xf32, #tpu.memory_space<vmem>>, vector<8x128xf32>
      tpu.vector_store %arg6[%c0_10, %c0_11], %11 {strides = array<i32>} : memref<8x128xf32, #tpu.memory_space<vmem>>, vector<8x128xf32>,
    } else {
    }
    %c0 = arith.constant 0 : index
    %c0_1 = arith.constant 0 : index
    %3 = vector.load %arg6[%c0, %c0_1] : memref<8x128xf32, #tpu.memory_space<vmem>>, vector<8x128xf32>
    %c0_2 = arith.constant 0 : index
    %c0_3 = arith.constant 0 : index
    %4 = vector.load %arg3[%c0_2, %c0_3] : memref<8x128xf32, #tpu.memory_space<vmem>>, vector<8x128xf32>
    %c0_4 = arith.constant 0 : index
    %c0_5 = arith.constant 0 : index
    %5 = vector.load %arg4[%c0_4, %c0_5] : memref<128x128xf32, #tpu.memory_space<vmem>>, vector<128x128xf32>
    %cst = arith.constant dense<0.000000e+00> : vector<8x128xf32>
    %6 = tpu.matmul %4, %5, %cst {dimension_numbers = #tpu.dot_dimension_numbers<[1], [1], [0], [0], [0, 0, 1, 0], [], []>} : vector<8x128xf32>, vector<128x128xf32>, vector<8x128xf32> -> vector<8x128xf32>
    %7 = arith.addf %3, %6 : vector<8x128xf32>
    %c0_6 = arith.constant 0 : index
    %c0_7 = arith.constant 0 : index
    %8 = vector.load %arg6[%c0_6, %c0_7] : memref<8x128xf32, #tpu.memory_space<vmem>>, vector<8x128xf32>
    tpu.vector_store %arg6[%c0_6, %c0_7], %7 {strides = array<i32>} : memref<8x128xf32, #tpu.memory_space<vmem>>, vector<8x128xf32>,
    return
  }
  func.func @transform_0(%arg0: i32, %arg1: i32, %arg2: i32) -> (i32, i32) {
    %c0_i32 = arith.constant 0 : i32
    return %arg0, %arg2 : i32, i32
  }
  func.func @transform_1(%arg0: i32, %arg1: i32, %arg2: i32) -> (i32, i32) {
    %c0_i32 = arith.constant 0 : i32
    return %arg1, %arg2 : i32, i32
  }
  func.func @transform_2(%arg0: i32, %arg1: i32, %arg2: i32) -> (i32, i32) {
    %c0_i32 = arith.constant 0 : i32
    %c0_i32_0 = arith.constant 0 : i32
    return %c0_i32, %arg1 : i32, i32
  }
  func.func @transform_3(%arg0: i32, %arg1: i32, %arg2: i32) -> (i32, i32) {
    %c0_i32 = arith.constant 0 : i32
    return %arg0, %arg1 : i32, i32
  }
}

</mosaic_0001>

<llo_original>
// kernel: tpu_custom_call.1
$region0: #{tpu_custom_call.1}
  #allocation0 [shape = 'u32[]', space=smem, size = 0x4, offset = 0x4, fixed_abs, tag = 'smem constant byte address 0x4 - core index']
  #allocation1 [shape = 'u32[144,128]{1,0:T(1,128)}', space=vmem, size = 0x12000, scoped, tag = 'internal scratch']
  %s0 = inlined_call_operand.hbm [shape: f32[8,128], index: 0, kind: input, shape index: {}]
  %s1 = inlined_call_operand.hbm [shape: f32[128,128], index: 1, kind: input, shape index: {}]
  %s2 = inlined_call_operand.vmem [shape: f32[1,128], index: 2, kind: input, shape index: {}]
  %s3 = inlined_call_operand.hbm [shape: f32[8,128], index: 3, kind: output, shape index: {}]
  %s4 = sld [smem:[#allocation0]]
  $region34: #{tpu_custom_call.1} parent=0
    _
  %s6 = ssub.s32 1, %s4
  %s7 = scalar_select 0, %s6, %s4
  $region1: #{tpu_custom_call.1} parent=0
    #allocation2 [shape = 'u8[4096]{0}', space=vmem, size = 0x1000, scoped, tag = 'input window, operand 0, single buffered']
    #allocation3 [shape = 's32[1]{0}', space=sflag, size = 0x4, scoped, tag = 'scoped memory for tpu_custom_call.1']
    #allocation4 [shape = 's32[1]{0}', space=sflag, size = 0x4, scoped, tag = 'scoped memory for tpu_custom_call.1']
    #allocation5 [shape = 'u8[65536]{0}', space=vmem, size = 0x10000, scoped, tag = 'input window, operand 1, single buffered']
    #allocation6 [shape = 's32[1]{0}', space=sflag, size = 0x4, scoped, tag = 'scoped memory for tpu_custom_call.1']
    #allocation7 [shape = 'u8[4096]{0}', space=vmem, size = 0x1000, scoped, tag = 'output window, operand 0, single buffered']
    %8 = vsyncpa [#allocation3], 0
    %9 = vsyncpa [#allocation6], 0
    %10 = vsyncpa [#allocation4], 0
    // Predicated region
    $region2: #{tpu_custom_call.1} parent=1 // pred_check
      _
    $region3: #{tpu_custom_call.1} parent=1 // pred_check_branch
      %12 = sbr.rel (0) target = $region5
    $region4: #{tpu_custom_call.1} parent=1 // pred_region
      %s14 = ssub.s32 128, 128
      %15 = vsyncadd [#allocation3], %s14
      %s17 = sshll.u32 [#allocation2], 4
      %s18 = int_to_ptr.vmem [resolvable:$true] %s17
      %20 = dma.hbm_to_vmem [thread:$0]  %s0, 128, %s18, [#allocation3]
    $region5: #{tpu_custom_call.1} parent=1 // pred_fallthru
      _
    // Predicated region
    $region6: #{tpu_custom_call.1} parent=1 // pred_check
      _
    $region7: #{tpu_custom_call.1} parent=1 // pred_check_branch
      %22 = sbr.rel (0) target = $region9
    $region8: #{tpu_custom_call.1} parent=1 // pred_region
      %s24 = ssub.s32 2048, 2048
      %25 = vsyncadd [#allocation6], %s24
      %s26 = sshll.u32 [#allocation5], 4
      %s27 = int_to_ptr.vmem [resolvable:$true] %s26
      %32 = dma.hbm_to_vmem [thread:$0]  %s1, 2048, %s27, [#allocation6], 128, 128, 8
    $region9: #{tpu_custom_call.1} parent=1 // pred_fallthru
      _
    // Predicated region
    $region10: #{tpu_custom_call.1} parent=1 // pred_check
      _
    $region11: #{tpu_custom_call.1} parent=1 // pred_check_branch
      %34 = sbr.rel (0) target = $region13
    $region12: #{tpu_custom_call.1} parent=1 // pred_region
      _
    $region13: #{tpu_custom_call.1} parent=1 // pred_fallthru
      _
    // Predicated region
    $region14: #{tpu_custom_call.1} parent=1 // pred_check
      _
    $region15: #{tpu_custom_call.1} parent=1 // pred_check_branch
      %36 = sbr.rel (0) target = $region17
    $region16: #{tpu_custom_call.1} parent=1 // pred_region
      %37 = dma.done [#allocation3], 128
    $region17: #{tpu_custom_call.1} parent=1 // pred_fallthru
      _
    // Predicated region
    $region18: #{tpu_custom_call.1} parent=1 // pred_check
      _
    $region19: #{tpu_custom_call.1} parent=1 // pred_check_branch
      %39 = sbr.rel (0) target = $region21
    $region20: #{tpu_custom_call.1} parent=1 // pred_region
      %40 = dma.done [#allocation6], 2048
    $region21: #{tpu_custom_call.1} parent=1 // pred_fallthru
      _
    %p41 = scmp.eq.s32.totalorder 0, 0
    // Predicated region
    $region22: #{tpu_custom_call.1} parent=1 // pred_check
      %p42 = pneg %p41
    $region23: #{tpu_custom_call.1} parent=1 // pred_check_branch
      %44 = sbr.rel (%p42) target = $region25
    $region24: #{tpu_custom_call.1} parent=1 // pred_region
      %v45 = vld [vmem:[%s2] sm:$0x1]
      %v47 = vlaneseq
      %v48 = vshrl.u32 %v47, 7
      %v49 = vsub.s32 0, %v48
      %v50 = vrot.slane %v45, %v49
      %52 = vst [vmem:[#allocation7] sm:$0xff] %v50
    $region25: #{tpu_custom_call.1} parent=1 // pred_fallthru
      _
    %v53 = vld [vmem:[#allocation7] sm:$0xff]
    %v54 = vld [vmem:[#allocation2] sm:$0xff]
    %v55 = vld [vmem:[#allocation5] sm:$0xff]
    %v56 = vld [vmem:[#allocation5 + $0x8] sm:$0xff]
    %v57 = vld [vmem:[#allocation5 + $0x10] sm:$0xff]
    %v58 = vld [vmem:[#allocation5 + $0x18] sm:$0xff]
    %v59 = vld [vmem:[#allocation5 + $0x20] sm:$0xff]
    %v60 = vld [vmem:[#allocation5 + $0x28] sm:$0xff]
    %v61 = vld [vmem:[#allocation5 + $0x30] sm:$0xff]
    %v62 = vld [vmem:[#allocation5 + $0x38] sm:$0xff]
    %v63 = vld [vmem:[#allocation5 + $0x40] sm:$0xff]
    %v64 = vld [vmem:[#allocation5 + $0x48] sm:$0xff]
    %v65 = vld [vmem:[#allocation5 + $0x50] sm:$0xff]
    %v66 = vld [vmem:[#allocation5 + $0x58] sm:$0xff]
    %v67 = vld [vmem:[#allocation5 + $0x60] sm:$0xff]
    %v68 = vld [vmem:[#allocation5 + $0x68] sm:$0xff]
    %v69 = vld [vmem:[#allocation5 + $0x70] sm:$0xff]
    %v70 = vld [vmem:[#allocation5 + $0x78] sm:$0xff]
    %71 = vmatprep.subr.mxu0 0.0
    %72 = vmatpush1.xpose.msra.mxu0 %v70
    %73 = vmatprep.subr.mxu0 0.0
    %74 = vmatpush1.xpose.msra.mxu0 %v69
    %75 = vmatprep.subr.mxu0 0.0
    %76 = vmatpush1.xpose.msra.mxu0 %v68
    %77 = vmatprep.subr.mxu0 0.0
    %78 = vmatpush1.xpose.msra.mxu0 %v67
    %79 = vmatprep.subr.mxu0 0.0
    %80 = vmatpush1.xpose.msra.mxu0 %v66
    %81 = vmatprep.subr.mxu0 0.0
    %82 = vmatpush1.xpose.msra.mxu0 %v65
    %83 = vmatprep.subr.mxu0 0.0
    %84 = vmatpush1.xpose.msra.mxu0 %v64
    %85 = vmatprep.subr.mxu0 0.0
    %86 = vmatpush1.xpose.msra.mxu0 %v63
    %87 = vmatprep.subr.mxu0 0.0
    %88 = vmatpush1.xpose.msra.mxu0 %v62
    %89 = vmatprep.subr.mxu0 0.0
    %90 = vmatpush1.xpose.msra.mxu0 %v61
    %91 = vmatprep.subr.mxu0 0.0
    %92 = vmatpush1.xpose.msra.mxu0 %v60
    %93 = vmatprep.subr.mxu0 0.0
    %94 = vmatpush1.xpose.msra.mxu0 %v59
    %95 = vmatprep.subr.mxu0 0.0
    %96 = vmatpush1.xpose.msra.mxu0 %v58
    %97 = vmatprep.subr.mxu0 0.0
    %98 = vmatpush1.xpose.msra.mxu0 %v57
    %99 = vmatprep.subr.mxu0 0.0
    %100 = vmatpush1.xpose.msra.mxu0 %v56
    %101 = vmatprep.subr.mxu0 0.0
    %102 = vmatpush1.xpose.msra.mxu0 %v55
    %103 = vmatprep.subr.mxu0 0.0
    %104 = vmatpush2.xpose.msra.mxu0 0.0
    %105 = vmatprep.subr.mxu0 0.0
    %106 = vmatpush2.xpose.msra.mxu0 0.0
    %107 = vmatprep.subr.mxu0 0.0
    %108 = vmatpush2.xpose.msra.mxu0 0.0
    %109 = vmatprep.subr.mxu0 0.0
    %110 = vmatpush2.xpose.msra.mxu0 0.0
    %111 = vmatprep.subr.mxu0 0.0
    %112 = vmatpush2.xpose.msra.mxu0 0.0
    %113 = vmatprep.subr.mxu0 0.0
    %114 = vmatpush2.xpose.msra.mxu0 0.0
    %115 = vmatprep.subr.mxu0 0.0
    %116 = vmatpush2.xpose.msra.mxu0 0.0
    %117 = vmatprep.subr.mxu0 0.0
    %118 = vmatpush2.xpose.msra.mxu0 0.0
    %119 = vmatprep.subr.mxu0 0.0
    %120 = vmatpush2.xpose.msra.mxu0 0.0
    %121 = vmatprep.subr.mxu0 0.0
    %122 = vmatpush2.xpose.msra.mxu0 0.0
    %123 = vmatprep.subr.mxu0 0.0
    %124 = vmatpush2.xpose.msra.mxu0 0.0
    %125 = vmatprep.subr.mxu0 0.0
    %126 = vmatpush2.xpose.msra.mxu0 0.0
    %127 = vmatprep.subr.mxu0 0.0
    %128 = vmatpush2.xpose.msra.mxu0 0.0
    %129 = vmatprep.subr.mxu0 0.0
    %130 = vmatpush2.xpose.msra.mxu0 0.0
    %131 = vmatprep.subr.mxu0 0.0
    %132 = vmatpush2.xpose.msra.mxu0 0.0
    %133 = vmatprep.subr.mxu0 0.0
    %134 = vmatpush2.xpose.msra.mxu0 0.0
    %135 = vmatprep.mubr.f32.mxu0 0.0
    %136 = vmatmul.mubr.f32.gmra.mxu0 %v54
    %v137 = vpop.f32.mrf.mxu0
    %v138 = vadd.f32 0.0, %v137
    %v139 = vpop.f32.mrf.mxu0
    %140 = vdwg.mxu0
    %v141 = vadd.f32 %v53, %v138
    %142 = vst [vmem:[#allocation7] sm:$0xff] %v141
    // Predicated region
    $region26: #{tpu_custom_call.1} parent=1 // pred_check
      _
    $region27: #{tpu_custom_call.1} parent=1 // pred_check_branch
      %144 = sbr.rel (0) target = $region29
    $region28: #{tpu_custom_call.1} parent=1 // pred_region
      %s146 = ssub.s32 128, 128
      %147 = vsyncadd [#allocation4], %s146
      %s149 = sshll.u32 [#allocation7], 4
      %s150 = int_to_ptr.vmem [resolvable:$true] %s149
      %152 = dma.vmem_to_hbm [thread:$0]  %s150, 128, %s3, [#allocation4]
    $region29: #{tpu_custom_call.1} parent=1 // pred_fallthru
      _
    // Predicated region
    $region30: #{tpu_custom_call.1} parent=1 // pred_check
      _
    $region31: #{tpu_custom_call.1} parent=1 // pred_check_branch
      %154 = sbr.rel (0) target = $region33
    $region32: #{tpu_custom_call.1} parent=1 // pred_region
      %155 = dma.done [#allocation4], 128
    $region33: #{tpu_custom_call.1} parent=1 // pred_fallthru
      _
    %156 = vsyncpa [#allocation3], 1
    %157 = vsyncpa [#allocation6], 1
    %158 = vsyncpa [#allocation4], 1

</llo_original>
